<compile_context>
chip_gen: v6e
topology: v6e:2x2x1
jax: 0.10.0
libtpu: 0.0.40
codegen_flags: <defaults>
</compile_context>

<pallas_src>
import jax
import jax.numpy as jnp
from jax.experimental import pallas as pl
from jax.experimental.pallas import tpu as pltpu


NOUT_PAD = 128  # lane-dense output width


# ----------------------------- Pallas kernel --------------------------------
def dssm_kernel(x_ref, w1_ref, b1_ref, w2_ref, b2_ref, wo_ref, bo_ref, out_ref):
    # x_ref: (TB, 2*E) bf16   -- [user_emb | movie_emb] rows
    # w1_ref: (2*E, 2*H1) bf16 block-diagonal, BN folded; b1_ref: (1, 2*H1) f32
    # w2_ref: (2*H1, 2*H2) bf16 block-diagonal, BN folded; b2_ref: (1, 2*H2) f32
    # wo_ref: (2*H2, 128) bf16 = [wo; wo] zero-padded; bo_ref: (1, 128) f32
    h1 = jnp.dot(x_ref[...], w1_ref[...], preferred_element_type=jnp.float32)
    h1 = jnp.maximum(h1 + b1_ref[...], 0.0)                       # f32 elementwise

    h2 = jnp.dot(h1.astype(jnp.bfloat16), w2_ref[...],
                 preferred_element_type=jnp.float32)
    h2 = jnp.maximum(h2 + b2_ref[...], 0.0)                       # f32 elementwise

    out = jnp.dot(h2.astype(jnp.bfloat16), wo_ref[...],
                  preferred_element_type=jnp.float32) + bo_ref[...]
    out_ref[...] = out


# ------------------------------ host wrapper ---------------------------------
def _round_up(x, m):
    return ((x + m - 1) // m) * m


def dssm_forward(user_ids, movie_ids, fused, *, batch_tile=256):
    # --- glue: embedding gather + concat + bf16 cast (single XLA fusion) ---
    ue = fused["user_emb"][user_ids]                   # (B, E) f32
    me = fused["movie_emb"][movie_ids]                 # (B, E) f32
    x = jnp.concatenate([ue, me], axis=-1).astype(jnp.bfloat16)   # (B, 2E)

    B, D = x.shape
    n_out = fused["n_out"]

    TB = min(batch_tile, _round_up(B, 8))
    Bp = _round_up(B, TB)
    if Bp != B:
        x = jnp.pad(x, ((0, Bp - B), (0, 0)))

    w1, b1 = fused["w1"], fused["b1"]
    w2, b2 = fused["w2"], fused["b2"]
    wo, bo = fused["wo"], fused["bo"]

    out = pl.pallas_call(
        dssm_kernel,
        out_shape=jax.ShapeDtypeStruct((Bp, NOUT_PAD), jnp.float32),
        grid=(Bp // TB,),
        in_specs=[
            pl.BlockSpec((TB, D), lambda i: (i, 0)),          # activations: tiled
            pl.BlockSpec(w1.shape, lambda i: (0, 0)),         # weights: resident
            pl.BlockSpec(b1.shape, lambda i: (0, 0)),
            pl.BlockSpec(w2.shape, lambda i: (0, 0)),
            pl.BlockSpec(b2.shape, lambda i: (0, 0)),
            pl.BlockSpec(wo.shape, lambda i: (0, 0)),
            pl.BlockSpec(bo.shape, lambda i: (0, 0)),
        ],
        out_specs=pl.BlockSpec((TB, NOUT_PAD), lambda i: (i, 0)),
        compiler_params=pltpu.CompilerParams(
            dimension_semantics=("parallel",)),
    )(x, w1, b1, w2, b2, wo, bo)

    return out[:B, :n_out]


# ------------------------ parameter construction ----------------------------
def xavier_normal(key, shape_out_in):
    # matches torch.nn.init.xavier_normal_ on a 2-D (out, in) tensor
    fan_out, fan_in = shape_out_in
    std = (2.0 / (fan_in + fan_out)) ** 0.5
    return std * jax.random.normal(key, shape_out_in, dtype=jnp.float32)


def make_raw_params(key, num_users, num_movies, emb_dim, hidden, n_out, bn_eps=1e-5):
    """Parameters in the original PyTorch layout: Linear weights (out, in)."""
    keys = jax.random.split(key, 8)
    h1, h2 = hidden

    def linear(k, in_f, out_f):
        return xavier_normal(k, (out_f, in_f)), jnp.zeros((out_f,), jnp.float32)

    def bn(out_f):
        # (gamma, beta, running_mean, running_var) at init
        return (jnp.ones((out_f,), jnp.float32), jnp.zeros((out_f,), jnp.float32),
                jnp.zeros((out_f,), jnp.float32), jnp.ones((out_f,), jnp.float32))

    return dict(
        bn_eps=bn_eps, n_out=n_out,
        user_emb=xavier_normal(keys[0], (num_users, emb_dim)),
        movie_emb=xavier_normal(keys[1], (num_movies, emb_dim)),
        lin1u=linear(keys[2], emb_dim, h1), bn1u=bn(h1),
        lin2u=linear(keys[3], h1, h2),      bn2u=bn(h2),
        lin1m=linear(keys[4], emb_dim, h1), bn1m=bn(h1),
        lin2m=linear(keys[5], h1, h2),      bn2m=bn(h2),
        out=linear(keys[6], h2, n_out),
    )


def prepare_fused_params(raw):
    """Fold BN into Linear, merge branches into block-diagonal weights, pad
    the output layer to 128 lanes, cast matmul operands to bf16."""
    eps = raw["bn_eps"]

    def fold_bn(lin, bn):
        w, b = lin                       # (out, in), (out,)
        g, beta, mean, var = bn
        s = g / jnp.sqrt(var + eps)      # (out,)
        w_f = (w * s[:, None]).T         # -> (in, out), BN folded
        b_f = b * s + (beta - mean * s)  # (out,)
        return w_f, b_f

    def block_diag2(a, b):
        za = jnp.zeros((a.shape[0], b.shape[1]), a.dtype)
        zb = jnp.zeros((b.shape[0], a.shape[1]), b.dtype)
        return jnp.concatenate(
            [jnp.concatenate([a, za], axis=1),
             jnp.concatenate([zb, b], axis=1)], axis=0)

    w1u, b1u = fold_bn(raw["lin1u"], raw["bn1u"])
    w2u, b2u = fold_bn(raw["lin2u"], raw["bn2u"])
    w1m, b1m = fold_bn(raw["lin1m"], raw["bn1m"])
    w2m, b2m = fold_bn(raw["lin2m"], raw["bn2m"])

    w1 = block_diag2(w1u, w1m)                                # (2E, 2H1)
    b1 = jnp.concatenate([b1u, b1m])[None, :]                 # (1, 2H1)
    w2 = block_diag2(w2u, w2m)                                # (2H1, 2H2)
    b2 = jnp.concatenate([b2u, b2m])[None, :]                 # (1, 2H2)

    wo_raw, bo_raw = raw["out"]                               # (n_out, h2), (n_out,)
    n_out, h2 = wo_raw.shape
    wo = jnp.concatenate([wo_raw.T, wo_raw.T], axis=0)        # (2H2, n_out) folds u+m
    wo = jnp.pad(wo, ((0, 0), (0, NOUT_PAD - n_out)))         # lane-dense (2H2, 128)
    bo = jnp.pad(bo_raw, (0, NOUT_PAD - n_out))[None, :]      # (1, 128)

    return dict(
        user_emb=raw["user_emb"], movie_emb=raw["movie_emb"], n_out=n_out,
        w1=w1.astype(jnp.bfloat16), b1=b1,
        w2=w2.astype(jnp.bfloat16), b2=b2,
        wo=wo.astype(jnp.bfloat16), bo=bo,
    )


# ---------------------------- pure-JAX reference -----------------------------
def dssm_reference(user_ids, movie_ids, raw):
    """Original module semantics in f32 (BN in eval mode, dropout identity)."""
    eps = raw["bn_eps"]
    ue = raw["user_emb"][user_ids]
    me = raw["movie_emb"][movie_ids]

    def bn_eval(h, bn):
        g, beta, mean, var = bn
        return (h - mean) / jnp.sqrt(var + eps) * g + beta

    def branch(x, lin1, bn1, lin2, bn2):
        w1, b1 = lin1
        w2, b2 = lin2
        h = jnp.maximum(bn_eval(x @ w1.T + b1, bn1), 0.0)
        h = jnp.maximum(bn_eval(h @ w2.T + b2, bn2), 0.0)
        return h

    u = branch(ue, raw["lin1u"], raw["bn1u"], raw["lin2u"], raw["bn2u"])
    m = branch(me, raw["lin1m"], raw["bn1m"], raw["lin2m"], raw["bn2m"])
    wo, bo = raw["out"]
    return (u + m) @ wo.T + bo


# --------------------------------- main --------------------------------------
if __name__ == "__main__":
    NUM_USERS, NUM_MOVIES = 100, 200
    EMB_DIM = 32
    HIDDEN = [64, 32]
    N_OUT = 5            # binary_classification=False -> 5 outputs
    BATCH = 8

    key = jax.random.PRNGKey(0)
    pkey, ukey, mkey = jax.random.split(key, 3)

    raw = make_raw_params(pkey, NUM_USERS, NUM_MOVIES, EMB_DIM, HIDDEN, N_OUT)
    fused = prepare_fused_params(raw)

    user_ids = jax.random.randint(ukey, (BATCH,), 0, NUM_USERS)
    movie_ids = jax.random.randint(mkey, (BATCH,), 0, NUM_MOVIES)

    out = dssm_forward(user_ids, movie_ids, fused)
    out = jax.block_until_ready(out)

    ref = dssm_reference(user_ids, movie_ids, raw)
    assert out.shape == (BATCH, N_OUT)
    # bf16 matmul operands vs. f32 reference -> modest tolerance
    assert jnp.allclose(out, ref, atol=2e-2, rtol=2e-2), "mismatch vs reference"

    # TODO(synk): BN/dropout are inference-mode (running stats / identity);
    # training-mode batch statistics and stochastic dropout are out of scope.
    print("KERNEL_OK")
</pallas_src>

<mosaic_0001>
module attributes {stable_mosaic.version = 11 : i64} {
  func.func @dssm_kernel(%arg0: i32, %arg1: memref<8x64xbf16, #tpu.memory_space<vmem>>, %arg2: memref<64x128xbf16, #tpu.memory_space<vmem>>, %arg3: memref<1x128xf32, #tpu.memory_space<vmem>>, %arg4: memref<128x64xbf16, #tpu.memory_space<vmem>>, %arg5: memref<1x64xf32, #tpu.memory_space<vmem>>, %arg6: memref<64x128xbf16, #tpu.memory_space<vmem>>, %arg7: memref<1x128xf32, #tpu.memory_space<vmem>>, %arg8: memref<8x128xf32, #tpu.memory_space<vmem>>) attributes {dimension_semantics = [#tpu.dimension_semantics<parallel>], iteration_bounds = array<i64: 1>, scalar_prefetch = 0 : i64, scratch_operands = 0 : i64, tpu.core_type = #tpu.core_type<tc>, window_params = [{transform_indices = @transform_0, window_bounds = array<i64: 8, 64>}, {pipeline_mode = #tpu.pipeline_mode<synchronous>, transform_indices = @transform_1, window_bounds = array<i64: 64, 128>}, {pipeline_mode = #tpu.pipeline_mode<synchronous>, transform_indices = @transform_2, window_bounds = array<i64: 1, 128>}, {pipeline_mode = #tpu.pipeline_mode<synchronous>, transform_indices = @transform_3, window_bounds = array<i64: 128, 64>}, {pipeline_mode = #tpu.pipeline_mode<synchronous>, transform_indices = @transform_4, window_bounds = array<i64: 1, 64>}, {pipeline_mode = #tpu.pipeline_mode<synchronous>, transform_indices = @transform_5, window_bounds = array<i64: 64, 128>}, {pipeline_mode = #tpu.pipeline_mode<synchronous>, transform_indices = @transform_6, window_bounds = array<i64: 1, 128>}, {transform_indices = @transform_7, window_bounds = array<i64: 8, 128>}]} {
    %c0 = arith.constant 0 : index
    %c0_0 = arith.constant 0 : index
    %0 = vector.load %arg1[%c0, %c0_0] : memref<8x64xbf16, #tpu.memory_space<vmem>>, vector<8x64xbf16>
    %c0_1 = arith.constant 0 : index
    %c0_2 = arith.constant 0 : index
    %1 = vector.load %arg2[%c0_1, %c0_2] : memref<64x128xbf16, #tpu.memory_space<vmem>>, vector<64x128xbf16>
    %cst = arith.constant dense<0.000000e+00> : vector<8x128xf32>
    %2 = tpu.matmul %0, %1, %cst {dimension_numbers = #tpu.dot_dimension_numbers<[1], [0], [0], [1], [0, 0, 1, 1], [], []>} : vector<8x64xbf16>, vector<64x128xbf16>, vector<8x128xf32> -> vector<8x128xf32>
    %c0_3 = arith.constant 0 : index
    %c0_4 = arith.constant 0 : index
    %3 = vector.load %arg3[%c0_3, %c0_4] : memref<1x128xf32, #tpu.memory_space<vmem>>, vector<1x128xf32>
    %4 = vector.broadcast %3 : vector<1x128xf32> to vector<8x128xf32>
    %5 = arith.addf %2, %4 : vector<8x128xf32>
    %cst_5 = arith.constant 0.000000e+00 : f32
    %6 = vector.broadcast %cst_5 : f32 to vector<8x128xf32>
    %7 = arith.maximumf %5, %6 : vector<8x128xf32>
    %8 = arith.truncf %7 : vector<8x128xf32> to vector<8x128xbf16>
    %c0_6 = arith.constant 0 : index
    %c0_7 = arith.constant 0 : index
    %9 = vector.load %arg4[%c0_6, %c0_7] : memref<128x64xbf16, #tpu.memory_space<vmem>>, vector<128x64xbf16>
    %cst_8 = arith.constant dense<0.000000e+00> : vector<8x64xf32>
    %10 = tpu.matmul %8, %9, %cst_8 {dimension_numbers = #tpu.dot_dimension_numbers<[1], [0], [0], [1], [0, 0, 1, 1], [], []>} : vector<8x128xbf16>, vector<128x64xbf16>, vector<8x64xf32> -> vector<8x64xf32>
    %c0_9 = arith.constant 0 : index
    %c0_10 = arith.constant 0 : index
    %11 = vector.load %arg5[%c0_9, %c0_10] : memref<1x64xf32, #tpu.memory_space<vmem>>, vector<1x64xf32>
    %12 = vector.broadcast %11 : vector<1x64xf32> to vector<8x64xf32>
    %13 = arith.addf %10, %12 : vector<8x64xf32>
    %cst_11 = arith.constant 0.000000e+00 : f32
    %14 = vector.broadcast %cst_11 : f32 to vector<8x64xf32>
    %15 = arith.maximumf %13, %14 : vector<8x64xf32>
    %16 = arith.truncf %15 : vector<8x64xf32> to vector<8x64xbf16>
    %c0_12 = arith.constant 0 : index
    %c0_13 = arith.constant 0 : index
    %17 = vector.load %arg6[%c0_12, %c0_13] : memref<64x128xbf16, #tpu.memory_space<vmem>>, vector<64x128xbf16>
    %cst_14 = arith.constant dense<0.000000e+00> : vector<8x128xf32>
    %18 = tpu.matmul %16, %17, %cst_14 {dimension_numbers = #tpu.dot_dimension_numbers<[1], [0], [0], [1], [0, 0, 1, 1], [], []>} : vector<8x64xbf16>, vector<64x128xbf16>, vector<8x128xf32> -> vector<8x128xf32>
    %c0_15 = arith.constant 0 : index
    %c0_16 = arith.constant 0 : index
    %19 = vector.load %arg7[%c0_15, %c0_16] : memref<1x128xf32, #tpu.memory_space<vmem>>, vector<1x128xf32>
    %20 = vector.broadcast %19 : vector<1x128xf32> to vector<8x128xf32>
    %21 = arith.addf %18, %20 : vector<8x128xf32>
    %c0_17 = arith.constant 0 : index
    %c0_18 = arith.constant 0 : index
    %22 = vector.load %arg8[%c0_17, %c0_18] : memref<8x128xf32, #tpu.memory_space<vmem>>, vector<8x128xf32>
    tpu.vector_store %arg8[%c0_17, %c0_18], %21 {strides = array<i32>} : memref<8x128xf32, #tpu.memory_space<vmem>>, vector<8x128xf32>,
    return
  }
  func.func @transform_0(%arg0: i32) -> (i32, i32) {
    %c0_i32 = arith.constant 0 : i32
    %c0_i32_0 = arith.constant 0 : i32
    return %arg0, %c0_i32 : i32, i32
  }
  func.func @transform_1(%arg0: i32) -> (i32, i32) {
    %c0_i32 = arith.constant 0 : i32
    %c0_i32_0 = arith.constant 0 : i32
    %c0_i32_1 = arith.constant 0 : i32
    return %c0_i32, %c0_i32_0 : i32, i32
  }
  func.func @transform_2(%arg0: i32) -> (i32, i32) {
    %c0_i32 = arith.constant 0 : i32
    %c0_i32_0 = arith.constant 0 : i32
    %c0_i32_1 = arith.constant 0 : i32
    return %c0_i32, %c0_i32_0 : i32, i32
  }
  func.func @transform_3(%arg0: i32) -> (i32, i32) {
    %c0_i32 = arith.constant 0 : i32
    %c0_i32_0 = arith.constant 0 : i32
    %c0_i32_1 = arith.constant 0 : i32
    return %c0_i32, %c0_i32_0 : i32, i32
  }
  func.func @transform_4(%arg0: i32) -> (i32, i32) {
    %c0_i32 = arith.constant 0 : i32
    %c0_i32_0 = arith.constant 0 : i32
    %c0_i32_1 = arith.constant 0 : i32
    return %c0_i32, %c0_i32_0 : i32, i32
  }
  func.func @transform_5(%arg0: i32) -> (i32, i32) {
    %c0_i32 = arith.constant 0 : i32
    %c0_i32_0 = arith.constant 0 : i32
    %c0_i32_1 = arith.constant 0 : i32
    return %c0_i32, %c0_i32_0 : i32, i32
  }
  func.func @transform_6(%arg0: i32) -> (i32, i32) {
    %c0_i32 = arith.constant 0 : i32
    %c0_i32_0 = arith.constant 0 : i32
    %c0_i32_1 = arith.constant 0 : i32
    return %c0_i32, %c0_i32_0 : i32, i32
  }
  func.func @transform_7(%arg0: i32) -> (i32, i32) {
    %c0_i32 = arith.constant 0 : i32
    %c0_i32_0 = arith.constant 0 : i32
    return %arg0, %c0_i32 : i32, i32
  }
}

</mosaic_0001>

<llo_original>
// kernel: tpu_custom_call.1
$region0: #{tpu_custom_call.1}
  #allocation0 [shape = 'u32[]', space=smem, size = 0x4, offset = 0x4, fixed_abs, tag = 'smem constant byte address 0x4 - core index']
  #allocation1 [shape = 'u32[144,128]{1,0:T(1,128)}', space=vmem, size = 0x12000, scoped, tag = 'internal scratch']
  %s0 = inlined_call_operand.vmem [shape: bf16[8,64], index: 0, kind: input, shape index: {}]
  %s1 = inlined_call_operand.vmem [shape: bf16[64,128], index: 1, kind: input, shape index: {}]
  %s2 = inlined_call_operand.vmem [shape: f32[1,128], index: 2, kind: input, shape index: {}]
  %s3 = inlined_call_operand.vmem [shape: bf16[128,64], index: 3, kind: input, shape index: {}]
  %s4 = inlined_call_operand.vmem [shape: f32[1,64], index: 4, kind: input, shape index: {}]
  %s5 = inlined_call_operand.vmem [shape: bf16[64,128], index: 5, kind: input, shape index: {}]
  %s6 = inlined_call_operand.vmem [shape: f32[1,128], index: 6, kind: input, shape index: {}]
  %s7 = inlined_call_operand.hbm [shape: f32[8,128], index: 7, kind: output, shape index: {}]
  %s8 = sld [smem:[#allocation0]]
  $region38: #{tpu_custom_call.1} parent=0
    _
  %s10 = ssub.s32 1, %s8
  %s11 = scalar_select 0, %s10, %s8
  $region1: #{tpu_custom_call.1} parent=0
    #allocation2 [shape = 'u8[4096]{0}', space=vmem, size = 0x1000, scoped, tag = 'output window, operand 0, single buffered']
    #allocation3 [shape = 's32[1]{0}', space=sflag, size = 0x4, scoped, tag = 'scoped memory for tpu_custom_call.1']
    %12 = vsyncpa [#allocation3], 0
    // Predicated region
    $region2: #{tpu_custom_call.1} parent=1 // pred_check
      _
    $region3: #{tpu_custom_call.1} parent=1 // pred_check_branch
      %14 = sbr.rel (0) target = $region5
    $region4: #{tpu_custom_call.1} parent=1 // pred_region
      _
    $region5: #{tpu_custom_call.1} parent=1 // pred_fallthru
      _
    // Predicated region
    $region6: #{tpu_custom_call.1} parent=1 // pred_check
      _
    $region7: #{tpu_custom_call.1} parent=1 // pred_check_branch
      %16 = sbr.rel (0) target = $region9
    $region8: #{tpu_custom_call.1} parent=1 // pred_region
      _
    $region9: #{tpu_custom_call.1} parent=1 // pred_fallthru
      _
    // Predicated region
    $region10: #{tpu_custom_call.1} parent=1 // pred_check
      _
    $region11: #{tpu_custom_call.1} parent=1 // pred_check_branch
      %18 = sbr.rel (0) target = $region13
    $region12: #{tpu_custom_call.1} parent=1 // pred_region
      _
    $region13: #{tpu_custom_call.1} parent=1 // pred_fallthru
      _
    // Predicated region
    $region14: #{tpu_custom_call.1} parent=1 // pred_check
      _
    $region15: #{tpu_custom_call.1} parent=1 // pred_check_branch
      %20 = sbr.rel (0) target = $region17
    $region16: #{tpu_custom_call.1} parent=1 // pred_region
      _
    $region17: #{tpu_custom_call.1} parent=1 // pred_fallthru
      _
    // Predicated region
    $region18: #{tpu_custom_call.1} parent=1 // pred_check
      _
    $region19: #{tpu_custom_call.1} parent=1 // pred_check_branch
      %22 = sbr.rel (0) target = $region21
    $region20: #{tpu_custom_call.1} parent=1 // pred_region
      _
    $region21: #{tpu_custom_call.1} parent=1 // pred_fallthru
      _
    // Predicated region
    $region22: #{tpu_custom_call.1} parent=1 // pred_check
      _
    $region23: #{tpu_custom_call.1} parent=1 // pred_check_branch
      %24 = sbr.rel (0) target = $region25
    $region24: #{tpu_custom_call.1} parent=1 // pred_region
      _
    $region25: #{tpu_custom_call.1} parent=1 // pred_fallthru
      _
    // Predicated region
    $region26: #{tpu_custom_call.1} parent=1 // pred_check
      _
    $region27: #{tpu_custom_call.1} parent=1 // pred_check_branch
      %26 = sbr.rel (0) target = $region29
    $region28: #{tpu_custom_call.1} parent=1 // pred_region
      _
    $region29: #{tpu_custom_call.1} parent=1 // pred_fallthru
      _
    %v28 = vld [vmem:[%s0] sm:$0xf]
    %v29 = vld [vmem:[%s1] sm:$0xf]
    %v30 = vld [vmem:[%s1 + $0x4] sm:$0xf]
    %v31 = vld [vmem:[%s1 + $0x8] sm:$0xf]
    %v32 = vld [vmem:[%s1 + $0xc] sm:$0xf]
    %v33 = vld [vmem:[%s1 + $0x10] sm:$0xf]
    %v34 = vld [vmem:[%s1 + $0x14] sm:$0xf]
    %v35 = vld [vmem:[%s1 + $0x18] sm:$0xf]
    %v36 = vld [vmem:[%s1 + $0x1c] sm:$0xf]
    %v37 = vld [vmem:[%s2] sm:$0x1]
    %v39 = vlaneseq
    %v40 = vshrl.u32 %v39, 7
    %v41 = vsub.s32 0, %v40
    %v42 = vrot.slane %v37, %v41
    %v52 = vunpack.c.l.b16 %v29
    %v53 = vunpack.c.l.b16 %v30
    %v54 = vunpack.c.l.b16 %v31
    %v55 = vunpack.c.l.b16 %v32
    %v56 = vunpack.c.l.b16 %v33
    %v57 = vunpack.c.l.b16 %v34
    %v58 = vunpack.c.l.b16 %v35
    %v59 = vunpack.c.l.b16 %v36
    %v60 = vpack.c.b16 %v53, %v52
    %v61 = vpack.c.b16 %v55, %v54
    %v62 = vpack.c.b16 %v57, %v56
    %v63 = vpack.c.b16 %v59, %v58
    %vm68 = vcmask 523264
    %v70 = vsel %vm68, %v28, 0
    %72 = vmatprep.subr.bf16.mxu0 0
    %73 = vmatpush1.bf16.msra.mxu0 0
    %74 = vmatprep.subr.bf16.mxu0 0
    %75 = vmatpush1.bf16.msra.mxu0 0
    %76 = vmatprep.subr.bf16.mxu0 0
    %77 = vmatpush1.bf16.msra.mxu0 0
    %78 = vmatprep.subr.bf16.mxu0 0
    %79 = vmatpush1.bf16.msra.mxu0 0
    %80 = vmatprep.subr.bf16.mxu0 0
    %81 = vmatpush1.bf16.msra.mxu0 %v63
    %82 = vmatprep.subr.bf16.mxu0 0
    %83 = vmatpush1.bf16.msra.mxu0 %v62
    %84 = vmatprep.subr.bf16.mxu0 0
    %85 = vmatpush1.bf16.msra.mxu0 %v61
    %86 = vmatprep.subr.bf16.mxu0 0
    %87 = vmatpush1.bf16.msra.mxu0 %v60
    %88 = vmatprep.subr.bf16.mxu0 0
    %89 = vmatpush2.bf16.msra.mxu0 0
    %90 = vmatprep.subr.bf16.mxu0 0
    %91 = vmatpush2.bf16.msra.mxu0 0
    %92 = vmatprep.subr.bf16.mxu0 0
    %93 = vmatpush2.bf16.msra.mxu0 0
    %94 = vmatprep.subr.bf16.mxu0 0
    %95 = vmatpush2.bf16.msra.mxu0 0
    %96 = vmatprep.subr.bf16.mxu0 0
    %97 = vmatpush2.bf16.msra.mxu0 0
    %98 = vmatprep.subr.bf16.mxu0 0
    %99 = vmatpush2.bf16.msra.mxu0 0
    %100 = vmatprep.subr.bf16.mxu0 0
    %101 = vmatpush2.bf16.msra.mxu0 0
    %102 = vmatprep.subr.bf16.mxu0 0
    %103 = vmatpush2.bf16.msra.mxu0 0
    %104 = vmatprep.mubr.bf16.mxu0 0
    %105 = vmatmul.mubr.bf16.gmra.mxu0 %v70
    %v106 = vpop.f32.mrf.mxu0
    %v107 = vadd.f32 %v42, %v106
    %v108 = vpop.f32.mrf.mxu0
    %v109 = vpop.f32.mrf.mxu0
    %v110 = vpop.f32.mrf.mxu0
    %111 = vdwg.mxu0
    %v112 = vmax.f32 %v107, 0.0
    %v113 = vpack.c.bf16 %v112, %v112
    %v114 = vld [vmem:[%s3] sm:$0xf]
    %v115 = vld [vmem:[%s3 + $0x4] sm:$0xf]
    %v116 = vld [vmem:[%s3 + $0x8] sm:$0xf]
    %v117 = vld [vmem:[%s3 + $0xc] sm:$0xf]
    %v118 = vld [vmem:[%s3 + $0x10] sm:$0xf]
    %v119 = vld [vmem:[%s3 + $0x14] sm:$0xf]
    %v120 = vld [vmem:[%s3 + $0x18] sm:$0xf]
    %v121 = vld [vmem:[%s3 + $0x1c] sm:$0xf]
    %v122 = vld [vmem:[%s3 + $0x20] sm:$0xf]
    %v123 = vld [vmem:[%s3 + $0x24] sm:$0xf]
    %v124 = vld [vmem:[%s3 + $0x28] sm:$0xf]
    %v125 = vld [vmem:[%s3 + $0x2c] sm:$0xf]
    %v126 = vld [vmem:[%s3 + $0x30] sm:$0xf]
    %v127 = vld [vmem:[%s3 + $0x34] sm:$0xf]
    %v128 = vld [vmem:[%s3 + $0x38] sm:$0xf]
    %v129 = vld [vmem:[%s3 + $0x3c] sm:$0xf]
    %v130 = vld [vmem:[%s4] sm:$0x1]
    %v132 = vlaneseq
    %v133 = vshrl.u32 %v132, 7
    %v134 = vsub.s32 0, %v133
    %v135 = vrot.slane %v130, %v134
    %v153 = vunpack.c.l.b16 %v114
    %v154 = vunpack.c.l.b16 %v115
    %v155 = vunpack.c.l.b16 %v116
    %v156 = vunpack.c.l.b16 %v117
    %v157 = vunpack.c.l.b16 %v118
    %v158 = vunpack.c.l.b16 %v119
    %v159 = vunpack.c.l.b16 %v120
    %v160 = vunpack.c.l.b16 %v121
    %v161 = vunpack.c.l.b16 %v122
    %v162 = vunpack.c.l.b16 %v123
    %v163 = vunpack.c.l.b16 %v124
    %v164 = vunpack.c.l.b16 %v125
    %v165 = vunpack.c.l.b16 %v126
    %v166 = vunpack.c.l.b16 %v127
    %v167 = vunpack.c.l.b16 %v128
    %v168 = vunpack.c.l.b16 %v129
    %v169 = vpack.c.b16 %v154, %v153
    %v170 = vpack.c.b16 %v156, %v155
    %v171 = vpack.c.b16 %v158, %v157
    %v172 = vpack.c.b16 %v160, %v159
    %v173 = vpack.c.b16 %v162, %v161
    %v174 = vpack.c.b16 %v164, %v163
    %v175 = vpack.c.b16 %v166, %v165
    %v176 = vpack.c.b16 %v168, %v167
    %185 = vmatprep.subr.bf16.mxu0 0
    %186 = vmatpush1.bf16.msra.mxu0 %v176
    %187 = vmatprep.subr.bf16.mxu0 0
    %188 = vmatpush1.bf16.msra.mxu0 %v175
    %189 = vmatprep.subr.bf16.mxu0 0
    %190 = vmatpush1.bf16.msra.mxu0 %v174
    %191 = vmatprep.subr.bf16.mxu0 0
    %192 = vmatpush1.bf16.msra.mxu0 %v173
    %193 = vmatprep.subr.bf16.mxu0 0
    %194 = vmatpush1.bf16.msra.mxu0 %v172
    %195 = vmatprep.subr.bf16.mxu0 0
    %196 = vmatpush1.bf16.msra.mxu0 %v171
    %197 = vmatprep.subr.bf16.mxu0 0
    %198 = vmatpush1.bf16.msra.mxu0 %v170
    %199 = vmatprep.subr.bf16.mxu0 0
    %200 = vmatpush1.bf16.msra.mxu0 %v169
    %201 = vmatprep.subr.bf16.mxu0 0
    %202 = vmatpush2.bf16.msra.mxu0 0
    %203 = vmatprep.subr.bf16.mxu0 0
    %204 = vmatpush2.bf16.msra.mxu0 0
    %205 = vmatprep.subr.bf16.mxu0 0
    %206 = vmatpush2.bf16.msra.mxu0 0
    %207 = vmatprep.subr.bf16.mxu0 0
    %208 = vmatpush2.bf16.msra.mxu0 0
    %209 = vmatprep.subr.bf16.mxu0 0
    %210 = vmatpush2.bf16.msra.mxu0 0
    %211 = vmatprep.subr.bf16.mxu0 0
    %212 = vmatpush2.bf16.msra.mxu0 0
    %213 = vmatprep.subr.bf16.mxu0 0
    %214 = vmatpush2.bf16.msra.mxu0 0
    %215 = vmatprep.subr.bf16.mxu0 0
    %216 = vmatpush2.bf16.msra.mxu0 0
    %217 = vmatprep.mubr.bf16.mxu0 0
    %218 = vmatmul.mubr.bf16.gmra.mxu0 %v113
    %v219 = vpop.f32.mrf.mxu0
    %v220 = vadd.f32 %v135, %v219
    %v221 = vpop.f32.mrf.mxu0
    %v222 = vpop.f32.mrf.mxu0
    %v223 = vpop.f32.mrf.mxu0
    %224 = vdwg.mxu0
    %v225 = vmax.f32 %v220, 0.0
    %v226 = vpack.c.bf16 %v225, %v225
    %v227 = vld [vmem:[%s5] sm:$0xf]
    %v228 = vld [vmem:[%s5 + $0x4] sm:$0xf]
    %v229 = vld [vmem:[%s5 + $0x8] sm:$0xf]
    %v230 = vld [vmem:[%s5 + $0xc] sm:$0xf]
    %v231 = vld [vmem:[%s5 + $0x10] sm:$0xf]
    %v232 = vld [vmem:[%s5 + $0x14] sm:$0xf]
    %v233 = vld [vmem:[%s5 + $0x18] sm:$0xf]
    %v234 = vld [vmem:[%s5 + $0x1c] sm:$0xf]
    %v235 = vld [vmem:[%s6] sm:$0x1]
    %v237 = vlaneseq
    %v238 = vshrl.u32 %v237, 7
    %v239 = vsub.s32 0, %v238
    %v240 = vrot.slane %v235, %v239
    %v250 = vunpack.c.l.b16 %v227
    %v251 = vunpack.c.l.b16 %v228
    %v252 = vunpack.c.l.b16 %v229
    %v253 = vunpack.c.l.b16 %v230
    %v254 = vunpack.c.l.b16 %v231
    %v255 = vunpack.c.l.b16 %v232
    %v256 = vunpack.c.l.b16 %v233
    %v257 = vunpack.c.l.b16 %v234
    %v258 = vpack.c.b16 %v251, %v250
    %v259 = vpack.c.b16 %v253, %v252
    %v260 = vpack.c.b16 %v255, %v254
    %v261 = vpack.c.b16 %v257, %v256
    %v267 = vsel %vm68, %v226, 0
    %269 = vmatprep.subr.bf16.mxu0 0
    %270 = vmatpush1.bf16.msra.mxu0 0
    %271 = vmatprep.subr.bf16.mxu0 0
    %272 = vmatpush1.bf16.msra.mxu0 0
    %273 = vmatprep.subr.bf16.mxu0 0
    %274 = vmatpush1.bf16.msra.mxu0 0
    %275 = vmatprep.subr.bf16.mxu0 0
    %276 = vmatpush1.bf16.msra.mxu0 0
    %277 = vmatprep.subr.bf16.mxu0 0
    %278 = vmatpush1.bf16.msra.mxu0 %v261
    %279 = vmatprep.subr.bf16.mxu0 0
    %280 = vmatpush1.bf16.msra.mxu0 %v260
    %281 = vmatprep.subr.bf16.mxu0 0
    %282 = vmatpush1.bf16.msra.mxu0 %v259
    %283 = vmatprep.subr.bf16.mxu0 0
    %284 = vmatpush1.bf16.msra.mxu0 %v258
    %285 = vmatprep.subr.bf16.mxu0 0
    %286 = vmatpush2.bf16.msra.mxu0 0
    %287 = vmatprep.subr.bf16.mxu0 0
    %288 = vmatpush2.bf16.msra.mxu0 0
    %289 = vmatprep.subr.bf16.mxu0 0
    %290 = vmatpush2.bf16.msra.mxu0 0
    %291 = vmatprep.subr.bf16.mxu0 0
    %292 = vmatpush2.bf16.msra.mxu0 0
    %293 = vmatprep.subr.bf16.mxu0 0
    %294 = vmatpush2.bf16.msra.mxu0 0
    %295 = vmatprep.subr.bf16.mxu0 0
    %296 = vmatpush2.bf16.msra.mxu0 0
    %297 = vmatprep.subr.bf16.mxu0 0
    %298 = vmatpush2.bf16.msra.mxu0 0
    %299 = vmatprep.subr.bf16.mxu0 0
    %300 = vmatpush2.bf16.msra.mxu0 0
    %301 = vmatprep.mubr.bf16.mxu0 0
    %302 = vmatmul.mubr.bf16.gmra.mxu0 %v267
    %v303 = vpop.f32.mrf.mxu0
    %v304 = vadd.f32 %v240, %v303
    %v305 = vpop.f32.mrf.mxu0
    %v306 = vpop.f32.mrf.mxu0
    %v307 = vpop.f32.mrf.mxu0
    %308 = vdwg.mxu0
    %309 = vst [vmem:[#allocation2] sm:$0xff] %v304
    // Predicated region
    $region30: #{tpu_custom_call.1} parent=1 // pred_check
      _
    $region31: #{tpu_custom_call.1} parent=1 // pred_check_branch
      %311 = sbr.rel (0) target = $region33
    $region32: #{tpu_custom_call.1} parent=1 // pred_region
      %s313 = ssub.s32 128, 128
      %314 = vsyncadd [#allocation3], %s313
      %s316 = sshll.u32 [#allocation2], 4
      %s317 = int_to_ptr.vmem [resolvable:$true] %s316
      %319 = dma.vmem_to_hbm [thread:$0]  %s317, 128, %s7, [#allocation3]
    $region33: #{tpu_custom_call.1} parent=1 // pred_fallthru
      _
    // Predicated region
    $region34: #{tpu_custom_call.1} parent=1 // pred_check
      _
    $region35: #{tpu_custom_call.1} parent=1 // pred_check_branch
      %321 = sbr.rel (0) target = $region37
    $region36: #{tpu_custom_call.1} parent=1 // pred_region
      %322 = dma.done [#allocation3], 128
    $region37: #{tpu_custom_call.1} parent=1 // pred_fallthru
      _
    %323 = vsyncpa [#allocation3], 1

</llo_original>
